<compile_context>
chip_gen: v7x
topology: tpu7x:2x2x1
jax: 0.10.0
libtpu: 0.0.40
codegen_flags: <defaults>
</compile_context>

<pallas_src>
import functools

import jax
import jax.numpy as jnp
from jax.experimental import pallas as pl
from jax.experimental.pallas import tpu as pltpu


def _fused_concat_conv1x1_kernel(x_ref, wt_ref, b_ref, o_ref):
    """One (batch, HW-tile) block: all per-net 1x1 convs fused into one matmul."""
    # x_ref: (C_in, TILE_HW), wt_ref: (C_out, C_in), b_ref: (C_out, 1)
    y = jnp.dot(wt_ref[...], x_ref[...], preferred_element_type=jnp.float32)
    o_ref[...] = (y + b_ref[...]).astype(o_ref.dtype)  # single lane-dense store


def _round_up(v, m):
    return ((v + m - 1) // m) * m


def _pick_tile_hw(hw, c_in, c_out, n_batch, *, itemsize=4,
                  vmem_budget=28 * 1024 * 1024, max_tile=8192):
    """Lane-dense HW tile: multiple of 128, VMEM-budgeted, >=2 grid steps if N==1."""
    if hw <= 128:
        return hw                                   # full-extent block, always legal
    # Resident weights/bias (double-counted conservatively for buffering).
    weight_bytes = 2 * (c_out * c_in + c_out) * itemsize
    # Double-buffered input + output tiles per lane of HW.
    per_lane = (c_in + c_out) * itemsize * 2
    budget_tile = max(128, (vmem_budget - weight_bytes) // per_lane)
    tile = min(_round_up(hw, 128), max_tile, budget_tile)
    tile = max(128, (tile // 128) * 128)
    # Guarantee >= 2 total "parallel" grid steps for v7x megacore when N == 1.
    if n_batch == 1 and pl.cdiv(hw, tile) < 2:
        tile = max(128, _round_up((hw + 1) // 2, 128))
    return tile


def fuse_params(params):
    """Done ONCE outside the forward: concat per-net weights/biases and transpose.

    params: list of (w, b) with w: (C_in, c_i), b: (1, c_i)
    returns wt: (C_out, C_in), b_col: (C_out, 1)
    """
    wt = jnp.concatenate([w for w, _ in params], axis=1).T
    b_col = jnp.concatenate([b for _, b in params], axis=1).T
    return wt, b_col


@functools.partial(jax.jit, static_argnames=("max_tile_hw", "out_dtype"))
def concat_forward(x_nchw, wt, b_col, *, max_tile_hw=8192, out_dtype=None):
    """x_nchw: (N, C_in, H, W).  wt: (C_out, C_in).  b_col: (C_out, 1)."""
    N, C_in, H, W = x_nchw.shape
    HW = H * W
    C_out = wt.shape[0]
    out_dtype = x_nchw.dtype if out_dtype is None else out_dtype

    x_flat = x_nchw.reshape(N, C_in, HW)             # pure view, no transpose
    tile_hw = _pick_tile_hw(HW, C_in, C_out, N, max_tile=max_tile_hw)
    grid = (N, pl.cdiv(HW, tile_hw))                 # ragged last block masked by Pallas

    out_flat = pl.pallas_call(
        _fused_concat_conv1x1_kernel,
        out_shape=jax.ShapeDtypeStruct((N, C_out, HW), out_dtype),
        grid_spec=pltpu.PrefetchScalarGridSpec(
            num_scalar_prefetch=0,
            grid=grid,
            in_specs=[
                # Leading size-1 batch dim squeezed -> kernel sees (C_in, tile_hw).
                pl.BlockSpec((None, C_in, tile_hw), lambda n, t: (n, 0, t)),
                pl.BlockSpec((C_out, C_in), lambda n, t: (0, 0)),
                pl.BlockSpec((C_out, 1), lambda n, t: (0, 0)),
            ],
            out_specs=pl.BlockSpec((None, C_out, tile_hw), lambda n, t: (n, 0, t)),
        ),
        compiler_params=pltpu.CompilerParams(
            dimension_semantics=("parallel", "parallel"),
            vmem_limit_bytes=32 * 1024 * 1024),
    )(x_flat, wt, b_col)

    return out_flat.reshape(N, C_out, H, W)


def _make_params(key, c_in, c_outs):
    """Deterministic per-net Conv2d(c_in, c_out, 1) weights, stored as (C_in, C_out)."""
    params = []
    for idx, c_out in enumerate(c_outs):
        kw, kb = jax.random.split(jax.random.fold_in(key, idx))
        w = jax.random.normal(kw, (c_in, c_out), jnp.float32) * 0.1
        b = jax.random.normal(kb, (1, c_out), jnp.float32) * 0.1
        params.append((w, b))
    return params


def _reference(x_nchw, params):
    """Pure-JAX reference: concat([conv1x1_i(x)], dim=1)."""
    outs = []
    for w, b in params:
        y = jnp.einsum('nchw,cd->ndhw', x_nchw, w) + b[0][None, :, None, None]
        outs.append(y)
    return jnp.concatenate(outs, axis=1)


if __name__ == "__main__":
    key = jax.random.PRNGKey(0)
    kx, kp = jax.random.split(key)

    N, C_in, H, W = 2, 4, 16, 16
    c_outs = (8, 8, 16)  # three sub-nets -> concat to 32 channels

    x = jax.random.normal(kx, (N, C_in, H, W), jnp.float32)
    params = _make_params(kp, C_in, c_outs)

    # Weight/bias fusion hoisted out of the per-call forward (done once).
    wt, b_col = fuse_params(params)

    out = concat_forward(x, wt, b_col)
    out = jax.block_until_ready(out)

    ref = _reference(x, params)
    assert out.shape == (N, sum(c_outs), H, W), out.shape
    assert jnp.allclose(out, ref, atol=1e-5, rtol=1e-5), "mismatch vs reference"

    print("KERNEL_OK")
</pallas_src>

<mosaic_0001>
module attributes {stable_mosaic.version = 11 : i64} {
  func.func @_fused_concat_conv1x1_kernel(%arg0: i32, %arg1: i32, %arg2: memref<1x4x256xf32, #tpu.memory_space<vmem>>, %arg3: memref<32x4xf32, #tpu.memory_space<vmem>>, %arg4: memref<32x1xf32, #tpu.memory_space<vmem>>, %arg5: memref<1x32x256xf32, #tpu.memory_space<vmem>>) attributes {dimension_semantics = [#tpu.dimension_semantics<parallel>, #tpu.dimension_semantics<parallel>], iteration_bounds = array<i64: 2, 1>, scalar_prefetch = 0 : i64, scratch_operands = 0 : i64, tpu.core_type = #tpu.core_type<tc>, window_params = [{transform_indices = @transform_0, window_bounds = array<i64: 1, 4, 256>}, {pipeline_mode = #tpu.pipeline_mode<synchronous>, transform_indices = @transform_1, window_bounds = array<i64: 32, 4>}, {pipeline_mode = #tpu.pipeline_mode<synchronous>, transform_indices = @transform_2, window_bounds = array<i64: 32, 1>}, {transform_indices = @transform_3, window_bounds = array<i64: 1, 32, 256>}]} {
    %c0 = arith.constant 0 : index
    %c0_0 = arith.constant 0 : index
    %0 = vector.load %arg3[%c0, %c0_0] : memref<32x4xf32, #tpu.memory_space<vmem>>, vector<32x4xf32>
    %c0_1 = arith.constant 0 : index
    %c0_2 = arith.constant 0 : index
    %c0_3 = arith.constant 0 : index
    %1 = vector.load %arg2[%c0_1, %c0_2, %c0_3] : memref<1x4x256xf32, #tpu.memory_space<vmem>>, vector<1x4x256xf32>
    %2 = vector.shape_cast %1 : vector<1x4x256xf32> to vector<4x256xf32>
    %cst = arith.constant dense<0.000000e+00> : vector<32x256xf32>
    %3 = tpu.matmul %0, %2, %cst {dimension_numbers = #tpu.dot_dimension_numbers<[1], [0], [0], [1], [0, 0, 1, 1], [], []>} : vector<32x4xf32>, vector<4x256xf32>, vector<32x256xf32> -> vector<32x256xf32>
    %c0_4 = arith.constant 0 : index
    %c0_5 = arith.constant 0 : index
    %4 = vector.load %arg4[%c0_4, %c0_5] : memref<32x1xf32, #tpu.memory_space<vmem>>, vector<32x1xf32>
    %5 = vector.broadcast %4 : vector<32x1xf32> to vector<32x256xf32>
    %6 = arith.addf %3, %5 : vector<32x256xf32>
    %c0_6 = arith.constant 0 : index
    %c0_7 = arith.constant 0 : index
    %c0_8 = arith.constant 0 : index
    %7 = vector.load %arg5[%c0_6, %c0_7, %c0_8] : memref<1x32x256xf32, #tpu.memory_space<vmem>>, vector<1x32x256xf32>
    %8 = vector.shape_cast %7 : vector<1x32x256xf32> to vector<32x256xf32>
    %9 = vector.shape_cast %6 : vector<32x256xf32> to vector<1x32x256xf32>
    tpu.vector_store %arg5[%c0_6, %c0_7, %c0_8], %9 {strides = array<i32>} : memref<1x32x256xf32, #tpu.memory_space<vmem>>, vector<1x32x256xf32>,
    return
  }
  func.func @transform_0(%arg0: i32, %arg1: i32) -> (i32, i32, i32) {
    %c0_i32 = arith.constant 0 : i32
    %c0_i32_0 = arith.constant 0 : i32
    return %arg0, %c0_i32, %arg1 : i32, i32, i32
  }
  func.func @transform_1(%arg0: i32, %arg1: i32) -> (i32, i32) {
    %c0_i32 = arith.constant 0 : i32
    %c0_i32_0 = arith.constant 0 : i32
    %c0_i32_1 = arith.constant 0 : i32
    return %c0_i32, %c0_i32_0 : i32, i32
  }
  func.func @transform_2(%arg0: i32, %arg1: i32) -> (i32, i32) {
    %c0_i32 = arith.constant 0 : i32
    %c0_i32_0 = arith.constant 0 : i32
    %c0_i32_1 = arith.constant 0 : i32
    return %c0_i32, %c0_i32_0 : i32, i32
  }
  func.func @transform_3(%arg0: i32, %arg1: i32) -> (i32, i32, i32) {
    %c0_i32 = arith.constant 0 : i32
    %c0_i32_0 = arith.constant 0 : i32
    return %arg0, %c0_i32, %arg1 : i32, i32, i32
  }
}

</mosaic_0001>

<llo_original>
// kernel: concat_forward.1
$region0: #{concat_forward.1}
  #allocation0 [shape = 'u32[]', space=smem, size = 0x4, offset = 0x4, fixed_abs, tag = 'smem constant byte address 0x4 - core index']
  #allocation1 [shape = 'u32[144,128]{1,0:T(1,128)}', space=vmem, size = 0x12000, scoped, tag = 'internal scratch']
  %s0 = inlined_call_operand.vmem [shape: f32[2,4,256], index: 0, kind: input, shape index: {}]
  %s1 = inlined_call_operand.vmem [shape: f32[32,4], index: 1, kind: input, shape index: {}]
  %s2 = inlined_call_operand.vmem [shape: f32[32,1], index: 2, kind: input, shape index: {}]
  %s3 = inlined_call_operand.vmem [shape: f32[2,32,256], index: 3, kind: output, shape index: {}]
  %s4 = sld [smem:[#allocation0]]
  $region45: #{concat_forward.1} parent=0
    _
  %s6 = ssub.s32 1, %s4
  %s7 = scalar_select 0, %s6, %s4
  loop: start=0, step=1, limit=4
  $region2: #{concat_forward.1} parent=0 // loop_pre_header
    _
  $region3: #{concat_forward.1} parent=0 // loop_header
    %s9 = sphi 0, %s13
    %p10 = scmp.ge.s32.totalorder %s9, 4
    %s16 = sphi 0, %s28
    %s17 = sphi 0, %s24
    %s18 = sphi 0, %s16
    %s19 = sphi 0, %s17
    %s20 = sphi 0, %s18
    %s21 = sphi 0, %s19
    %s33 = sphi 0, %s35
    %s36 = sphi 0, %s33
    %s37 = sphi 0, %s36
    %s53 = sphi 0, %s37
    %s57 = sphi 0, %s57
    %s59 = sphi 0, %s57
    %s60 = sphi 0, %s59
    %s74 = sphi 0, %s60
    %s78 = sphi 0, %s78
    %s80 = sphi 0, %s78
    %s81 = sphi 0, %s80
    %s95 = sphi 0, %s81
    %s103 = sphi 0, %s105
    %s106 = sphi 0, %s103
    %s107 = sphi 0, %s106
    %s123 = sphi 0, %s107
  $region4: #{concat_forward.1} parent=0 // loop_header_branch
    %12 = sbr.rel (%p10) target = $region8
  $region5: #{concat_forward.1} parent=0 // loop_body
    %s14 = ssub.s32 %s9, 1
    %s15 = ssub.s32 %s9, 2
    %s22 = sadd.s32 1, %s17
    %p23 = scmp.ge.s32.totalorder %s22, 1
    %s24 = scalar_select %p23, 0, %s22
    %s25 = sadd.s32 1, %s16
    %s26 = scalar_select %p23, %s25, %s16
    %p27 = scmp.ge.s32.totalorder %s26, 2
    %s28 = scalar_select %p27, 0, %s26
    %s29 = ssub.s32 %s16, %s28
    %s30 = ssub.s32 %s17, %s24
    %s31 = sor.u32 %s29, %s30
    %p32 = scmp.eq.s32.totalorder %s31, 0
    %s34 = sadd.s32 %s33, 1
    %s35 = scalar_select %p32, %s33, %s34
    %p38 = pneg %p32
    %p39 = scmp.eq.s32.totalorder %s9, 1
    %p40 = por %p38, %p39
    %p41 = scmp.ne.s32.totalorder %s33, %s36
    %p42 = scmp.eq.s32.totalorder %s9, 0
    %p43 = por %p41, %p42
    %p44 = scmp.ne.s32.totalorder %s33, %s36
    %p45 = scmp.eq.s32.totalorder %s14, 1
    %p46 = por %p44, %p45
    %p47 = scmp.ne.s32.totalorder %s36, %s37
    %p48 = scmp.eq.s32.totalorder %s14, 0
    %p49 = por %p47, %p48
    %p50 = scmp.ne.s32.totalorder %s36, %s37
    %p51 = scmp.eq.s32.totalorder %s15, 1
    %p52 = por %p50, %p51
    %p54 = scmp.ne.s32.totalorder %s37, %s53
    %p55 = scmp.eq.s32.totalorder %s15, 0
    %p56 = por %p54, %p55
    %s58 = sadd.s32 %s57, 1
    %p61 = scmp.eq.s32.totalorder %s9, 1
    %p62 = scmp.ne.s32.totalorder %s57, %s59
    %p63 = scmp.eq.s32.totalorder %s9, 0
    %p64 = por %p62, %p63
    %p65 = scmp.ne.s32.totalorder %s57, %s59
    %p66 = scmp.eq.s32.totalorder %s14, 1
    %p67 = por %p65, %p66
    %p68 = scmp.ne.s32.totalorder %s59, %s60
    %p69 = scmp.eq.s32.totalorder %s14, 0
    %p70 = por %p68, %p69
    %p71 = scmp.ne.s32.totalorder %s59, %s60
    %p72 = scmp.eq.s32.totalorder %s15, 1
    %p73 = por %p71, %p72
    %p75 = scmp.ne.s32.totalorder %s60, %s74
    %p76 = scmp.eq.s32.totalorder %s15, 0
    %p77 = por %p75, %p76
    %s79 = sadd.s32 %s78, 1
    %p82 = scmp.eq.s32.totalorder %s9, 1
    %p83 = scmp.ne.s32.totalorder %s78, %s80
    %p84 = scmp.eq.s32.totalorder %s9, 0
    %p85 = por %p83, %p84
    %p86 = scmp.ne.s32.totalorder %s78, %s80
    %p87 = scmp.eq.s32.totalorder %s14, 1
    %p88 = por %p86, %p87
    %p89 = scmp.ne.s32.totalorder %s80, %s81
    %p90 = scmp.eq.s32.totalorder %s14, 0
    %p91 = por %p89, %p90
    %p92 = scmp.ne.s32.totalorder %s80, %s81
    %p93 = scmp.eq.s32.totalorder %s15, 1
    %p94 = por %p92, %p93
    %p96 = scmp.ne.s32.totalorder %s81, %s95
    %p97 = scmp.eq.s32.totalorder %s15, 0
    %p98 = por %p96, %p97
    %s99 = ssub.s32 %s16, %s28
    %s100 = ssub.s32 %s17, %s24
    %s101 = sor.u32 %s99, %s100
    %p102 = scmp.eq.s32.totalorder %s101, 0
    %s104 = sadd.s32 %s103, 1
    %s105 = scalar_select %p102, %s103, %s104
    %p108 = pneg %p102
    %p109 = scmp.eq.s32.totalorder %s9, 1
    %p110 = por %p108, %p109
    %p111 = scmp.ne.s32.totalorder %s103, %s106
    %p112 = scmp.eq.s32.totalorder %s9, 0
    %p113 = por %p111, %p112
    %p114 = scmp.ne.s32.totalorder %s103, %s106
    %p115 = scmp.eq.s32.totalorder %s14, 1
    %p116 = por %p114, %p115
    %p117 = scmp.ne.s32.totalorder %s106, %s107
    %p118 = scmp.eq.s32.totalorder %s14, 0
    %p119 = por %p117, %p118
    %p120 = scmp.ne.s32.totalorder %s106, %s107
    %p121 = scmp.eq.s32.totalorder %s15, 1
    %p122 = por %p120, %p121
    %p124 = scmp.ne.s32.totalorder %s107, %s123
    %p125 = scmp.eq.s32.totalorder %s15, 0
    %p126 = por %p124, %p125
    %p127 = scmp.le.s32.totalorder 1, %s9
    %p128 = scmp.lt.s32.totalorder %s9, 3
    %p129 = pnand %p127, %p128
    %p130 = pneg %p129
    // Predicated region
    $region9: #{concat_forward.1} parent=5 // pred_check
      _
    $region10: #{concat_forward.1} parent=5 // pred_check_branch
      %132 = sbr.rel (%p129) target = $region12
    $region11: #{concat_forward.1} parent=5 // pred_region
      %s133 = ssub.s32 %s9, 1
      // Predicated region
      $region13: #{concat_forward.1} parent=11 // pred_check
        %p134 = pneg %p70
      $region14: #{concat_forward.1} parent=11 // pred_check_branch
        %136 = sbr.rel (%p134) target = $region16
      $region15: #{concat_forward.1} parent=11 // pred_region
        _
      $region16: #{concat_forward.1} parent=11 // pred_fallthru
        _
      // Predicated region
      $region17: #{concat_forward.1} parent=11 // pred_check
        %p137 = pneg %p91
      $region18: #{concat_forward.1} parent=11 // pred_check_branch
        %139 = sbr.rel (%p137) target = $region20
      $region19: #{concat_forward.1} parent=11 // pred_region
        _
      $region20: #{concat_forward.1} parent=11 // pred_fallthru
        _
    $region12: #{concat_forward.1} parent=5 // pred_fallthru
      _
    %p140 = scmp.lt.s32.totalorder %s9, 2
    // Predicated region
    $region21: #{concat_forward.1} parent=5 // pred_check
      %p141 = pneg %p140
    $region22: #{concat_forward.1} parent=5 // pred_check_branch
      %143 = sbr.rel (%p141) target = $region24
    $region23: #{concat_forward.1} parent=5 // pred_region
      // Predicated region
      $region25: #{concat_forward.1} parent=23 // pred_check
        %p144 = pneg %p43
      $region26: #{concat_forward.1} parent=23 // pred_check_branch
        %146 = sbr.rel (%p144) target = $region28
      $region27: #{concat_forward.1} parent=23 // pred_region
        %s147 = smul.u32 2, %s17
        %p148 = scmp.lt.s32.totalorder %s16, 1
        %s149 = scalar_select %p148, %s16, 1
        %p150 = scmp.lt.s32.totalorder %s147, 1
        %s151 = scalar_select %p150, %s147, 1
        %s152 = smul.addr %s149, 2
        %s153 = sadd.s32 %s151, %s152
        %s154 = smul.addr %s153, 4
        %s155 = scalar_lea.vmem %s0, %s154
        %s156 = smul.u32 2, %s17
      $region28: #{concat_forward.1} parent=23 // pred_fallthru
        _
    $region24: #{concat_forward.1} parent=5 // pred_fallthru
      _
    %p157 = scmp.le.s32.totalorder 1, %s9
    %p158 = scmp.lt.s32.totalorder %s9, 3
    %p159 = pnand %p157, %p158
    %p160 = pneg %p159
    // Predicated region
    $region29: #{concat_forward.1} parent=5 // pred_check
      _
    $region30: #{concat_forward.1} parent=5 // pred_check_branch
      %162 = sbr.rel (%p159) target = $region32
    $region31: #{concat_forward.1} parent=5 // pred_region
      %s163 = ssub.s32 %s9, 1
      %s164 = smul.u32 2, %s19
      %p165 = scmp.lt.s32.totalorder %s18, 1
      %s166 = scalar_select %p165, %s18, 1
      %p167 = scmp.lt.s32.totalorder %s164, 1
      %s168 = scalar_select %p167, %s164, 1
      %s169 = smul.addr %s166, 2
      %s170 = sadd.s32 %s168, %s169
      %s171 = smul.addr %s170, 4
      %s172 = scalar_lea.vmem %s0, %s171
      %p173 = pneg %p49
      %p174 = pneg %p46
      %p175 = pneg %p70
      %p176 = pneg %p67
      %p177 = pneg %p91
      %p178 = pneg %p88
      %p179 = pneg %p119
      %p180 = pneg %p116
      %s181 = smul.u32 2, %s19
      %p182 = scmp.lt.s32.totalorder %s18, 1
      %s183 = scalar_select %p182, %s18, 1
      %p184 = scmp.lt.s32.totalorder %s181, 1
      %s185 = scalar_select %p184, %s181, 1
      %s186 = smul.addr %s183, 8
      %s187 = sadd.s32 %s185, %s186
      %s188 = smul.addr %s187, 8
      %s189 = scalar_lea.vmem %s3, %s188
      %s190 = smul.u32 2, %s19
      %p191 = scmp.lt.s32.totalorder %s18, 1
      %s192 = scalar_select %p191, %s18, 1
      %p193 = scmp.lt.s32.totalorder %s190, 1
      %s194 = scalar_select %p193, %s190, 1
      %s195 = smul.addr %s192, 2
      %s196 = sadd.s32 %s194, %s195
      %s197 = smul.addr %s196, 4
      %s198 = scalar_lea.vmem %s0, %s197
      %s199 = smul.u32 2, %s19
      %s200 = smul.u32 2, %s19
      %p201 = scmp.lt.s32.totalorder %s18, 1
      %s202 = scalar_select %p201, %s18, 1
      %p203 = scmp.lt.s32.totalorder %s200, 1
      %s204 = scalar_select %p203, %s200, 1
      %s205 = smul.addr %s202, 8
      %s206 = sadd.s32 %s204, %s205
      %s207 = smul.addr %s206, 8
      %s208 = scalar_lea.vmem %s3, %s207
      %s209 = smul.u32 2, %s19
      %v210 = vld [vmem:[%s1] sm:$0xff]
      %v211 = vld [vmem:[%s1 + $0x8] sm:$0xff]
      %v212 = vld [vmem:[%s1 + $0x10] sm:$0xff]
      %v213 = vld [vmem:[%s1 + $0x18] sm:$0xff]
      %v214 = vld [vmem:[%s198] sm:$0xff]
      %v215 = vld [vmem:[%s2] sm:$0xff]
      %v216 = vld [vmem:[%s2 + $0x8] sm:$0xff]
      %v217 = vld [vmem:[%s2 + $0x10] sm:$0xff]
      %v218 = vld [vmem:[%s2 + $0x18] sm:$0xff]
      %220 = vset.pattern.permute.xlu0 0
      %221 = vperm.xlu0 %220, %v215
      %v222 = vpop.permute.xlu0 %221
      %225 = vset.pattern.permute.xlu0 0
      %226 = vperm.xlu0 %225, %v216
      %v227 = vpop.permute.xlu0 %226
      %230 = vset.pattern.permute.xlu0 0
      %231 = vperm.xlu0 %230, %v217
      %v232 = vpop.permute.xlu0 %231
      %235 = vset.pattern.permute.xlu0 0
      %236 = vperm.xlu0 %235, %v218
      %v237 = vpop.permute.xlu0 %236
      %v240 = vcombine.high %v214, %v214
      %vm241 = vcmask 31744
      %v243 = vsel %vm241, %v210, 0
      %v246 = vsel %vm241, %v211, 0
      %v249 = vsel %vm241, %v212, 0
      %v252 = vsel %vm241, %v213, 0
      %vm254 = vcmask 1043456
      %v255 = vsel %vm254, %v214, 0
      %v257 = vsel %vm254, %v240, 0
      %259 = vmatprep.subr.mxu0 %v257
      %260 = vmatpush1.msra.mxu0 %v255
      %261 = vmatprep.subr.mxu0 0.0
      %262 = vmatpush1.msra.mxu0 0.0
      %263 = vmatprep.subr.mxu0 0.0
      %264 = vmatpush1.msra.mxu0 0.0
      %265 = vmatprep.subr.mxu0 0.0
      %266 = vmatpush1.msra.mxu0 0.0
      %267 = vmatprep.subr.mxu0 0.0
      %268 = vmatpush1.msra.mxu0 0.0
      %269 = vmatprep.subr.mxu0 0.0
      %270 = vmatpush1.msra.mxu0 0.0
      %271 = vmatprep.subr.mxu0 0.0
      %272 = vmatpush1.msra.mxu0 0.0
      %273 = vmatprep.subr.mxu0 0.0
      %274 = vmatpush1.msra.mxu0 0.0
      %275 = vmatprep.subr.mxu0 0.0
      %276 = vmatpush1.msra.mxu0 0.0
      %277 = vmatprep.subr.mxu0 0.0
      %278 = vmatpush1.msra.mxu0 0.0
      %279 = vmatprep.subr.mxu0 0.0
      %280 = vmatpush1.msra.mxu0 0.0
      %281 = vmatprep.subr.mxu0 0.0
      %282 = vmatpush1.msra.mxu0 0.0
      %283 = vmatprep.subr.mxu0 0.0
      %284 = vmatpush1.msra.mxu0 0.0
      %285 = vmatprep.subr.mxu0 0.0
      %286 = vmatpush1.msra.mxu0 0.0
      %287 = vmatprep.subr.mxu0 0.0
      %288 = vmatpush1.msra.mxu0 0.0
      %289 = vmatprep.subr.mxu0 0.0
      %290 = vmatpush1.msra.mxu0 0.0
      %291 = vmatprep.subr.mxu0 0.0
      %292 = vmatpush1.msra.mxu0 0.0
      %293 = vmatprep.subr.mxu0 0.0
      %294 = vmatpush1.msra.mxu0 0.0
      %295 = vmatprep.subr.mxu0 0.0
      %296 = vmatpush1.msra.mxu0 0.0
      %297 = vmatprep.subr.mxu0 0.0
      %298 = vmatpush1.msra.mxu0 0.0
      %299 = vmatprep.subr.mxu0 0.0
      %300 = vmatpush1.msra.mxu0 0.0
      %301 = vmatprep.subr.mxu0 0.0
      %302 = vmatpush1.msra.mxu0 0.0
      %303 = vmatprep.subr.mxu0 0.0
      %304 = vmatpush1.msra.mxu0 0.0
      %305 = vmatprep.subr.mxu0 0.0
      %306 = vmatpush1.msra.mxu0 0.0
      %307 = vmatprep.subr.mxu0 0.0
      %308 = vmatpush1.msra.mxu0 0.0
      %309 = vmatprep.subr.mxu0 0.0
      %310 = vmatpush1.msra.mxu0 0.0
      %311 = vmatprep.subr.mxu0 0.0
      %312 = vmatpush1.msra.mxu0 0.0
      %313 = vmatprep.subr.mxu0 0.0
      %314 = vmatpush1.msra.mxu0 0.0
      %315 = vmatprep.subr.mxu0 0.0
      %316 = vmatpush1.msra.mxu0 0.0
      %317 = vmatprep.subr.mxu0 0.0
      %318 = vmatpush1.msra.mxu0 0.0
      %319 = vmatprep.subr.mxu0 0.0
      %320 = vmatpush1.msra.mxu0 0.0
      %321 = vmatprep.subr.mxu0 0.0
      %322 = vmatpush1.msra.mxu0 0.0
      %323 = vmatprep.mubr.f32.mxu0 0.0
      %324 = vmatmul.mubr.f32.gmra.mrb[0].mxu0 %v243
      %v325 = vpop.f32.mrb[0].mxu0
      %v326 = vadd.f32 %v222, %v325
      %v327 = vpop.f32.mrb[0].mxu0
      %v328 = vadd.f32 %v222, %v327
      %329 = vmatprep.mubr.f32.mxu0 0.0
      %330 = vmatmul.mubr.f32.gmra.mrb[0].mxu0 %v246
      %v331 = vpop.f32.mrb[0].mxu0
      %v332 = vadd.f32 %v227, %v331
      %v333 = vpop.f32.mrb[0].mxu0
      %v334 = vadd.f32 %v227, %v333
      %335 = vmatprep.mubr.f32.mxu0 0.0
      %336 = vmatmul.mubr.f32.gmra.mrb[0].mxu0 %v249
      %v337 = vpop.f32.mrb[0].mxu0
      %v338 = vadd.f32 %v232, %v337
      %v339 = vpop.f32.mrb[0].mxu0
      %v340 = vadd.f32 %v232, %v339
      %341 = vmatprep.mubr.f32.mxu0 0.0
      %342 = vmatmul.mubr.f32.gmra.mrb[0].mxu0 %v252
      %v343 = vpop.f32.mrb[0].mxu0
      %v344 = vadd.f32 %v237, %v343
      %v345 = vpop.f32.mrb[0].mxu0
      %v346 = vadd.f32 %v237, %v345
      %347 = vdwg.mxu0
      %348 = vst [vmem:[%s208] sm:$0xff] %v326
      %349 = vst [vmem:[%s208 + $0x8] sm:$0xff] %v328
      %350 = vst [vmem:[%s208 + $0x10] sm:$0xff] %v332
      %351 = vst [vmem:[%s208 + $0x18] sm:$0xff] %v334
      %352 = vst [vmem:[%s208 + $0x20] sm:$0xff] %v338
      %353 = vst [vmem:[%s208 + $0x28] sm:$0xff] %v340
      %354 = vst [vmem:[%s208 + $0x30] sm:$0xff] %v344
      %355 = vst [vmem:[%s208 + $0x38] sm:$0xff] %v346
      %s356 = smul.u32 2, %s19
      %p357 = scmp.lt.s32.totalorder %s18, 1
      %s358 = scalar_select %p357, %s18, 1
      %p359 = scmp.lt.s32.totalorder %s356, 1
      %s360 = scalar_select %p359, %s356, 1
      %s361 = smul.addr %s358, 8
      %s362 = sadd.s32 %s360, %s361
      %s363 = smul.addr %s362, 8
      %s364 = scalar_lea.vmem %s3, %s363
      // Predicated region
      $region33: #{concat_forward.1} parent=31 // pred_check
        %p365 = pneg %p116
      $region34: #{concat_forward.1} parent=31 // pred_check_branch
        %367 = sbr.rel (%p365) target = $region36
      $region35: #{concat_forward.1} parent=31 // pred_region
        %s368 = smul.u32 2, %s19
      $region36: #{concat_forward.1} parent=31 // pred_fallthru
        _
    $region32: #{concat_forward.1} parent=5 // pred_fallthru
      _
    %p369 = scmp.le.s32.totalorder 2, %s9
    // Predicated region
    $region37: #{concat_forward.1} parent=5 // pred_check
      %p370 = pneg %p369
    $region38: #{concat_forward.1} parent=5 // pred_check_branch
      %372 = sbr.rel (%p370) target = $region40
    $region39: #{concat_forward.1} parent=5 // pred_region
      %s373 = ssub.s32 %s9, 2
      // Predicated region
      $region41: #{concat_forward.1} parent=39 // pred_check
        %p374 = pneg %p122
      $region42: #{concat_forward.1} parent=39 // pred_check_branch
        %376 = sbr.rel (%p374) target = $region44
      $region43: #{concat_forward.1} parent=39 // pred_region
        %s377 = smul.u32 2, %s21
        %p378 = scmp.lt.s32.totalorder %s20, 1
        %s379 = scalar_select %p378, %s20, 1
        %p380 = scmp.lt.s32.totalorder %s377, 1
        %s381 = scalar_select %p380, %s377, 1
        %s382 = smul.addr %s379, 8
        %s383 = sadd.s32 %s381, %s382
        %s384 = smul.addr %s383, 8
        %s385 = scalar_lea.vmem %s3, %s384
      $region44: #{concat_forward.1} parent=39 // pred_fallthru
        _
    $region40: #{concat_forward.1} parent=5 // pred_fallthru
      _
  $region6: #{concat_forward.1} parent=0 // loop_footer
    %s13 = sadd.s32 1, %s9
  $region7: #{concat_forward.1} parent=0 // loop_footer_branch
    %8 = sbr.rel target = $region3
  $region8: #{concat_forward.1} parent=0 // loop_exit
    _

</llo_original>
